<compile_context>
chip_gen: v7x
topology: tpu7x:2x2x1
jax: 0.10.0
libtpu: 0.0.40
codegen_flags: <defaults>
</compile_context>

<pallas_src>
import jax
import jax.numpy as jnp
from jax.experimental import pallas as pl
from jax.experimental.pallas import tpu as pltpu

BN_EPS = 1e-5
LANE = 128


def _round_up(n, m):
    return ((n + m - 1) // m) * m


def _cdiv(a, b):
    return (a + b - 1) // b


# ----------------------------- kernels ---------------------------------------


def _tail_layers(h1_f32, w2_ref, b2_ref, w3_ref, b3_ref, o_ref):
    # Layer 1 activation
    h1 = jnp.maximum(h1_f32, 0.0).astype(w2_ref.dtype)
    # Layer 2: folded (Linear + BatchNorm) + Dropout (eval-mode identity) + ReLU
    # TODO(synk): training-mode dropout (random mask + 1/(1-p) scaling) not implemented.
    h2 = jnp.dot(h1, w2_ref[...], preferred_element_type=jnp.float32) + b2_ref[...]
    h2 = jnp.maximum(h2, 0.0).astype(w3_ref.dtype)
    # Layer 3: Linear -> logits
    out = jnp.dot(h2, w3_ref[...], preferred_element_type=jnp.float32) + b3_ref[...]
    o_ref[...] = out.astype(o_ref.dtype)


def classifier_kernel_resident(x_ref, w1_ref, b1_ref, w2_ref, b2_ref, w3_ref, b3_ref,
                               o_ref):
    """Whole w1 resident in VMEM; one grid axis over batch tiles."""
    h1 = jnp.dot(x_ref[...], w1_ref[...], preferred_element_type=jnp.float32) + b1_ref[...]
    _tail_layers(h1, w2_ref, b2_ref, w3_ref, b3_ref, o_ref)


def classifier_kernel_ktiled(x_ref, w1_ref, b1_ref, w2_ref, b2_ref, w3_ref, b3_ref,
                             o_ref, acc_ref):
    """Layer-1 K-tiled (large F): grid = (batch tiles, F chunks), f32 accumulator."""
    k = pl.program_id(1)

    @pl.when(k == 0)
    def _():
        acc_ref[...] = jnp.zeros_like(acc_ref)

    acc_ref[...] += jnp.dot(x_ref[...], w1_ref[...], preferred_element_type=jnp.float32)

    @pl.when(k == pl.num_programs(1) - 1)
    def _():
        _tail_layers(acc_ref[...] + b1_ref[...], w2_ref, b2_ref, w3_ref, b3_ref, o_ref)


# ----------------------------- wrapper ----------------------------------------


def classifier_forward(x, params, *, compute_dtype=jnp.bfloat16, batch_tile=512,
                       max_k_tile=None):
    """x: (B, F) float32. params: dict (see init_params). Returns (B, class_num) f32."""
    B, F = x.shape
    H1 = params["w1"].shape[1]
    H2 = params["w2"].shape[1]
    C = params["w3"].shape[1]

    # ---- Fold BatchNorm (running mean/var, gamma/beta, eps) + bias into the Linear (f32) ----
    # NOTE: the fold happens in f32; only the final cast to compute_dtype loses precision.
    # Use compute_dtype=jnp.float32 for precision-sensitive deployments.
    s1 = params["g1"] * jax.lax.rsqrt(params["v1"] + BN_EPS)          # (1, H1)
    w1f = params["w1"] * s1                                           # (F, H1)
    b1f = (params["b1"] - params["m1"]) * s1 + params["be1"]          # (1, H1)
    s2 = params["g2"] * jax.lax.rsqrt(params["v2"] + BN_EPS)          # (1, H2)
    w2f = params["w2"] * s2                                           # (H1, H2)
    b2f = (params["b2"] - params["m2"]) * s2 + params["be2"]          # (1, H2)
    w3, b3 = params["w3"], params["b3"]

    itemsize = jnp.dtype(compute_dtype).itemsize
    out_dtype = compute_dtype                     # bf16 logits writeback on the fast path
    out_itemsize = jnp.dtype(out_dtype).itemsize

    # ---- Lane-pad contraction / output dims to multiples of 128 ----
    Fp = _round_up(F, LANE)
    H1p = _round_up(H1, LANE)
    H2p = _round_up(H2, LANE)
    Cp = _round_up(C, LANE)

    # ---- Batch tile: sublane-pack aligned, low padding waste, >=2 tiles when possible ----
    pack = max(8, 32 // itemsize)                 # 8 rows f32, 16 rows bf16 per packed vreg
    num_tiles = max(1, _cdiv(B, batch_tile))
    if num_tiles == 1 and B >= 2 * pack:
        num_tiles = 2                             # give v7x's second TensorCore work
    TB = _round_up(_cdiv(B, num_tiles), pack)
    Bp = _round_up(B, TB)
    num_b = Bp // TB

    # ---- Generation-aware VMEM cap (leave headroom for compiler scratch) ----
    try:
        vmem_physical = int(pltpu.get_tpu_info().vmem_capacity_bytes)
    except Exception:
        vmem_physical = 64 * 1024 * 1024
    vmem_cap = vmem_physical * 3 // 4             # ~48 MiB v7x, ~96 MiB v5e/v6e

    X_BUFS_BUDGET = 3                             # budget for the deepest x pipeline
    OUT_BUFS = 2

    def footprint(tk, nk):
        w1_bufs = 1 if nk == 1 else 2             # resident (single) vs streamed (double)
        fp = (w1_bufs * tk * H1p + H1p * H2p + H2p * Cp) * itemsize
        fp += (H1p + H2p + Cp) * 4                # f32 biases
        fp += X_BUFS_BUDGET * TB * tk * itemsize  # x tiles
        fp += OUT_BUFS * TB * Cp * out_itemsize   # out tiles
        if nk > 1:
            fp += TB * H1p * 4                    # f32 layer-1 accumulator scratch
        return fp

    # ---- Pick layer-1 K tile: keep w1 resident when it fits, otherwise stream F chunks ----
    TK = Fp if max_k_tile is None else min(Fp, _round_up(max_k_tile, LANE))
    while footprint(TK, _cdiv(Fp, TK)) > vmem_cap and TK > LANE:
        TK = _round_up(TK // 2, LANE)
    Fp = _round_up(Fp, TK)                        # keep Fp an exact multiple of TK
    num_k = Fp // TK

    # ---- Zero-pad operands (padding is exact: extra rows/cols contribute nothing) ----
    def pad2(a, rows, cols):
        return jnp.pad(a, ((0, rows - a.shape[0]), (0, cols - a.shape[1])))

    xp = pad2(x, Bp, Fp).astype(compute_dtype)
    w1p = pad2(w1f, Fp, H1p).astype(compute_dtype)
    w2p = pad2(w2f, H1p, H2p).astype(compute_dtype)
    w3p = pad2(w3, H2p, Cp).astype(compute_dtype)
    b1p = pad2(b1f, 1, H1p).astype(jnp.float32)
    b2p = pad2(b2f, 1, H2p).astype(jnp.float32)
    b3p = pad2(b3, 1, Cp).astype(jnp.float32)

    total_steps = num_b * num_k
    X_BUFS = min(3, max(2, total_steps))          # deeper x pipeline only if grid is long enough

    def build(use_hints):
        def spec(shape, imap, bufs=None):
            if use_hints and bufs is not None and hasattr(pl, "Buffered"):
                return pl.BlockSpec(shape, imap, pipeline_mode=pl.Buffered(bufs))
            return pl.BlockSpec(shape, imap)

        if num_k == 1:
            grid = (num_b,)
            in_specs = [
                spec((TB, Fp), lambda i: (i, 0), X_BUFS),     # x marches over batch
                spec((Fp, H1p), lambda i: (0, 0), 1),         # resident weights: 1 buffer
                spec((1, H1p), lambda i: (0, 0), 1),
                spec((H1p, H2p), lambda i: (0, 0), 1),
                spec((1, H2p), lambda i: (0, 0), 1),
                spec((H2p, Cp), lambda i: (0, 0), 1),
                spec((1, Cp), lambda i: (0, 0), 1),
            ]
            out_spec = spec((TB, Cp), lambda i: (i, 0), OUT_BUFS)
            return (classifier_kernel_resident, grid, in_specs, out_spec, (),
                    ("parallel",))
        else:
            grid = (num_b, num_k)                 # reduction axis last
            in_specs = [
                spec((TB, TK), lambda i, k: (i, k), X_BUFS),  # x chunks over batch & K
                spec((TK, H1p), lambda i, k: (k, 0), 2),      # streamed w1 K-chunks
                spec((1, H1p), lambda i, k: (0, 0), 1),
                spec((H1p, H2p), lambda i, k: (0, 0), 1),
                spec((1, H2p), lambda i, k: (0, 0), 1),
                spec((H2p, Cp), lambda i, k: (0, 0), 1),
                spec((1, Cp), lambda i, k: (0, 0), 1),
            ]
            out_spec = spec((TB, Cp), lambda i, k: (i, 0), OUT_BUFS)
            scratch = (pltpu.VMEM((TB, H1p), jnp.float32),)
            return (classifier_kernel_ktiled, grid, in_specs, out_spec, scratch,
                    ("parallel", "arbitrary"))

    need = footprint(TK, num_k)
    vmem_limit = int(min(vmem_cap, max(8 * 1024 * 1024, int(need * 1.25) + (1 << 20))))

    # Cost estimate with REAL (unpadded) dims so XLA schedules this as the light op it is.
    cost = pl.CostEstimate(
        flops=2 * B * (F * H1 + H1 * H2 + H2 * C),
        transcendentals=0,
        bytes_accessed=int(B * F * itemsize
                           + (F * H1 + H1 * H2 + H2 * C) * itemsize
                           + (H1 + H2 + C) * 4
                           + B * C * out_itemsize),
    )

    def run(use_hints):
        kernel, grid, in_specs, out_spec, scratch, dims = build(use_hints)
        return pl.pallas_call(
            kernel,
            out_shape=jax.ShapeDtypeStruct((Bp, Cp), out_dtype),
            grid=grid,
            in_specs=in_specs,
            out_specs=out_spec,
            scratch_shapes=scratch,
            compiler_params=pltpu.CompilerParams(
                dimension_semantics=dims,
                vmem_limit_bytes=vmem_limit,
            ),
            cost_estimate=cost,
        )(xp, w1p, b1p, w2p, b2p, w3p, b3p)

    try:
        out = run(True)
    except Exception:
        # Fallback if this JAX build rejects pipeline_mode buffer-count hints.
        out = run(False)

    return out[:B, :C].astype(jnp.float32)


# ----------------------------- params / reference -----------------------------


def init_params(key, feature_size, class_num):
    h1 = feature_size // 2
    h2 = feature_size // 4
    ks = jax.random.split(key, 10)

    def lin_init(kw, kb, fan_in, fan_out):
        bound = 1.0 / jnp.sqrt(fan_in)
        w = jax.random.uniform(kw, (fan_in, fan_out), jnp.float32, -bound, bound)
        b = jax.random.uniform(kb, (1, fan_out), jnp.float32, -bound, bound)
        return w, b

    w1, b1 = lin_init(ks[0], ks[1], feature_size, h1)
    w2, b2 = lin_init(ks[2], ks[3], h1, h2)
    w3, b3 = lin_init(ks[4], ks[5], h2, class_num)

    # BatchNorm1d defaults: gamma=1, beta=0; perturb running stats so BN is non-trivial.
    m1 = 0.1 * jax.random.normal(ks[6], (1, h1), jnp.float32)
    v1 = jnp.ones((1, h1), jnp.float32) + 0.05 * jnp.abs(jax.random.normal(ks[7], (1, h1)))
    m2 = 0.1 * jax.random.normal(ks[8], (1, h2), jnp.float32)
    v2 = jnp.ones((1, h2), jnp.float32) + 0.05 * jnp.abs(jax.random.normal(ks[9], (1, h2)))

    return {
        "w1": w1, "b1": b1,
        "g1": jnp.ones((1, h1), jnp.float32), "be1": jnp.zeros((1, h1), jnp.float32),
        "m1": m1, "v1": v1,
        "w2": w2, "b2": b2,
        "g2": jnp.ones((1, h2), jnp.float32), "be2": jnp.zeros((1, h2), jnp.float32),
        "m2": m2, "v2": v2,
        "w3": w3, "b3": b3,
    }


def reference_forward(x, p):
    """Pure-JAX reference with identical eval-mode semantics (unfused BN, f32)."""
    h1 = x @ p["w1"] + p["b1"]
    h1 = (h1 - p["m1"]) / jnp.sqrt(p["v1"] + BN_EPS) * p["g1"] + p["be1"]
    h1 = jnp.maximum(h1, 0.0)
    h2 = h1 @ p["w2"] + p["b2"]
    h2 = (h2 - p["m2"]) / jnp.sqrt(p["v2"] + BN_EPS) * p["g2"] + p["be2"]
    h2 = jnp.maximum(h2, 0.0)
    return h2 @ p["w3"] + p["b3"]


if __name__ == "__main__":
    feature_size = 32
    class_num = 10
    batch = 8

    key = jax.random.PRNGKey(0)
    kx, kp = jax.random.split(key)
    x = jax.random.normal(kx, (batch, feature_size), jnp.float32)
    params = init_params(kp, feature_size, class_num)
    ref = reference_forward(x, params)

    # Exact-semantics check (f32 operands): validates BN folding + zero padding.
    out_f32 = jax.block_until_ready(classifier_forward(x, params, compute_dtype=jnp.float32))
    assert out_f32.shape == (batch, class_num)
    assert jnp.allclose(out_f32, ref, atol=1e-4, rtol=1e-4), "f32 kernel mismatch vs reference"

    # Performance path (bf16 matmul operands + bf16 logits writeback, f32 accumulation).
    out_bf16 = jax.block_until_ready(classifier_forward(x, params))
    assert out_bf16.shape == (batch, class_num)
    assert jnp.allclose(out_bf16, ref, atol=5e-2, rtol=5e-2), "bf16 kernel mismatch vs reference"

    # Exercise the K-tiled layer-1 fallback (used automatically when w1 exceeds VMEM).
    feature_size2 = 256
    kx2, kp2 = jax.random.split(jax.random.PRNGKey(1))
    x2 = jax.random.normal(kx2, (batch, feature_size2), jnp.float32)
    params2 = init_params(kp2, feature_size2, class_num)
    ref2 = reference_forward(x2, params2)
    out2 = jax.block_until_ready(
        classifier_forward(x2, params2, compute_dtype=jnp.float32, max_k_tile=128))
    assert out2.shape == (batch, class_num)
    assert jnp.allclose(out2, ref2, atol=1e-4, rtol=1e-4), "K-tiled kernel mismatch vs reference"

    print("KERNEL_OK")
</pallas_src>

<mosaic_0001>
module attributes {stable_mosaic.version = 11 : i64} {
  func.func @classifier_kernel_resident(%arg0: i32, %arg1: memref<8x128xf32, #tpu.memory_space<vmem>>, %arg2: memref<128x128xf32, #tpu.memory_space<vmem>>, %arg3: memref<1x128xf32, #tpu.memory_space<vmem>>, %arg4: memref<128x128xf32, #tpu.memory_space<vmem>>, %arg5: memref<1x128xf32, #tpu.memory_space<vmem>>, %arg6: memref<128x128xf32, #tpu.memory_space<vmem>>, %arg7: memref<1x128xf32, #tpu.memory_space<vmem>>, %arg8: memref<8x128xf32, #tpu.memory_space<vmem>>) attributes {dimension_semantics = [#tpu.dimension_semantics<parallel>], iteration_bounds = array<i64: 1>, scalar_prefetch = 0 : i64, scratch_operands = 0 : i64, tpu.core_type = #tpu.core_type<tc>, window_params = [{pipeline_mode = #tpu.pipeline_mode<double_buffered>, transform_indices = @transform_0, window_bounds = array<i64: 8, 128>}, {pipeline_mode = #tpu.pipeline_mode<synchronous>, transform_indices = @transform_1, window_bounds = array<i64: 128, 128>}, {pipeline_mode = #tpu.pipeline_mode<synchronous>, transform_indices = @transform_2, window_bounds = array<i64: 1, 128>}, {pipeline_mode = #tpu.pipeline_mode<synchronous>, transform_indices = @transform_3, window_bounds = array<i64: 128, 128>}, {pipeline_mode = #tpu.pipeline_mode<synchronous>, transform_indices = @transform_4, window_bounds = array<i64: 1, 128>}, {pipeline_mode = #tpu.pipeline_mode<synchronous>, transform_indices = @transform_5, window_bounds = array<i64: 128, 128>}, {pipeline_mode = #tpu.pipeline_mode<synchronous>, transform_indices = @transform_6, window_bounds = array<i64: 1, 128>}, {pipeline_mode = #tpu.pipeline_mode<double_buffered>, transform_indices = @transform_7, window_bounds = array<i64: 8, 128>}]} {
    %c0 = arith.constant 0 : index
    %c0_0 = arith.constant 0 : index
    %0 = vector.load %arg1[%c0, %c0_0] : memref<8x128xf32, #tpu.memory_space<vmem>>, vector<8x128xf32>
    %c0_1 = arith.constant 0 : index
    %c0_2 = arith.constant 0 : index
    %1 = vector.load %arg2[%c0_1, %c0_2] : memref<128x128xf32, #tpu.memory_space<vmem>>, vector<128x128xf32>
    %cst = arith.constant dense<0.000000e+00> : vector<8x128xf32>
    %2 = tpu.matmul %0, %1, %cst {dimension_numbers = #tpu.dot_dimension_numbers<[1], [0], [0], [1], [0, 0, 1, 1], [], []>} : vector<8x128xf32>, vector<128x128xf32>, vector<8x128xf32> -> vector<8x128xf32>
    %c0_3 = arith.constant 0 : index
    %c0_4 = arith.constant 0 : index
    %3 = vector.load %arg3[%c0_3, %c0_4] : memref<1x128xf32, #tpu.memory_space<vmem>>, vector<1x128xf32>
    %4 = vector.broadcast %3 : vector<1x128xf32> to vector<8x128xf32>
    %5 = arith.addf %2, %4 : vector<8x128xf32>
    %cst_5 = arith.constant 0.000000e+00 : f32
    %6 = vector.broadcast %cst_5 : f32 to vector<8x128xf32>
    %7 = arith.maximumf %5, %6 : vector<8x128xf32>
    %c0_6 = arith.constant 0 : index
    %c0_7 = arith.constant 0 : index
    %8 = vector.load %arg4[%c0_6, %c0_7] : memref<128x128xf32, #tpu.memory_space<vmem>>, vector<128x128xf32>
    %cst_8 = arith.constant dense<0.000000e+00> : vector<8x128xf32>
    %9 = tpu.matmul %7, %8, %cst_8 {dimension_numbers = #tpu.dot_dimension_numbers<[1], [0], [0], [1], [0, 0, 1, 1], [], []>} : vector<8x128xf32>, vector<128x128xf32>, vector<8x128xf32> -> vector<8x128xf32>
    %c0_9 = arith.constant 0 : index
    %c0_10 = arith.constant 0 : index
    %10 = vector.load %arg5[%c0_9, %c0_10] : memref<1x128xf32, #tpu.memory_space<vmem>>, vector<1x128xf32>
    %11 = vector.broadcast %10 : vector<1x128xf32> to vector<8x128xf32>
    %12 = arith.addf %9, %11 : vector<8x128xf32>
    %cst_11 = arith.constant 0.000000e+00 : f32
    %13 = vector.broadcast %cst_11 : f32 to vector<8x128xf32>
    %14 = arith.maximumf %12, %13 : vector<8x128xf32>
    %c0_12 = arith.constant 0 : index
    %c0_13 = arith.constant 0 : index
    %15 = vector.load %arg6[%c0_12, %c0_13] : memref<128x128xf32, #tpu.memory_space<vmem>>, vector<128x128xf32>
    %cst_14 = arith.constant dense<0.000000e+00> : vector<8x128xf32>
    %16 = tpu.matmul %14, %15, %cst_14 {dimension_numbers = #tpu.dot_dimension_numbers<[1], [0], [0], [1], [0, 0, 1, 1], [], []>} : vector<8x128xf32>, vector<128x128xf32>, vector<8x128xf32> -> vector<8x128xf32>
    %c0_15 = arith.constant 0 : index
    %c0_16 = arith.constant 0 : index
    %17 = vector.load %arg7[%c0_15, %c0_16] : memref<1x128xf32, #tpu.memory_space<vmem>>, vector<1x128xf32>
    %18 = vector.broadcast %17 : vector<1x128xf32> to vector<8x128xf32>
    %19 = arith.addf %16, %18 : vector<8x128xf32>
    %c0_17 = arith.constant 0 : index
    %c0_18 = arith.constant 0 : index
    %20 = vector.load %arg8[%c0_17, %c0_18] : memref<8x128xf32, #tpu.memory_space<vmem>>, vector<8x128xf32>
    tpu.vector_store %arg8[%c0_17, %c0_18], %19 {strides = array<i32>} : memref<8x128xf32, #tpu.memory_space<vmem>>, vector<8x128xf32>,
    return
  }
  func.func @transform_0(%arg0: i32) -> (i32, i32) {
    %c0_i32 = arith.constant 0 : i32
    %c0_i32_0 = arith.constant 0 : i32
    return %arg0, %c0_i32 : i32, i32
  }
  func.func @transform_1(%arg0: i32) -> (i32, i32) {
    %c0_i32 = arith.constant 0 : i32
    %c0_i32_0 = arith.constant 0 : i32
    %c0_i32_1 = arith.constant 0 : i32
    return %c0_i32, %c0_i32_0 : i32, i32
  }
  func.func @transform_2(%arg0: i32) -> (i32, i32) {
    %c0_i32 = arith.constant 0 : i32
    %c0_i32_0 = arith.constant 0 : i32
    %c0_i32_1 = arith.constant 0 : i32
    return %c0_i32, %c0_i32_0 : i32, i32
  }
  func.func @transform_3(%arg0: i32) -> (i32, i32) {
    %c0_i32 = arith.constant 0 : i32
    %c0_i32_0 = arith.constant 0 : i32
    %c0_i32_1 = arith.constant 0 : i32
    return %c0_i32, %c0_i32_0 : i32, i32
  }
  func.func @transform_4(%arg0: i32) -> (i32, i32) {
    %c0_i32 = arith.constant 0 : i32
    %c0_i32_0 = arith.constant 0 : i32
    %c0_i32_1 = arith.constant 0 : i32
    return %c0_i32, %c0_i32_0 : i32, i32
  }
  func.func @transform_5(%arg0: i32) -> (i32, i32) {
    %c0_i32 = arith.constant 0 : i32
    %c0_i32_0 = arith.constant 0 : i32
    %c0_i32_1 = arith.constant 0 : i32
    return %c0_i32, %c0_i32_0 : i32, i32
  }
  func.func @transform_6(%arg0: i32) -> (i32, i32) {
    %c0_i32 = arith.constant 0 : i32
    %c0_i32_0 = arith.constant 0 : i32
    %c0_i32_1 = arith.constant 0 : i32
    return %c0_i32, %c0_i32_0 : i32, i32
  }
  func.func @transform_7(%arg0: i32) -> (i32, i32) {
    %c0_i32 = arith.constant 0 : i32
    %c0_i32_0 = arith.constant 0 : i32
    return %arg0, %c0_i32 : i32, i32
  }
}

module attributes {stable_mosaic.version = 11 : i64} {
  func.func @classifier_kernel_resident(%arg0: i32, %arg1: memref<8x128xf32, #tpu.memory_space<vmem>>, %arg2: memref<128x128xf32, #tpu.memory_space<vmem>>, %arg3: memref<1x128xf32, #tpu.memory_space<vmem>>, %arg4: memref<128x128xf32, #tpu.memory_space<vmem>>, %arg5: memref<1x128xf32, #tpu.memory_space<vmem>>, %arg6: memref<128x128xf32, #tpu.memory_space<vmem>>, %arg7: memref<1x128xf32, #tpu.memory_space<vmem>>, %arg8: memref<8x128xf32, #tpu.memory_space<vmem>>) attributes {dimension_semantics = [#tpu.dimension_semantics<parallel>], iteration_bounds = array<i64: 1>, scalar_prefetch = 0 : i64, scratch_operands = 0 : i64, tpu.core_type = #tpu.core_type<tc>, window_params = [{transform_indices = @transform_0, window_bounds = array<i64: 8, 128>}, {pipeline_mode = #tpu.pipeline_mode<synchronous>, transform_indices = @transform_1, window_bounds = array<i64: 128, 128>}, {pipeline_mode = #tpu.pipeline_mode<synchronous>, transform_indices = @transform_2, window_bounds = array<i64: 1, 128>}, {pipeline_mode = #tpu.pipeline_mode<synchronous>, transform_indices = @transform_3, window_bounds = array<i64: 128, 128>}, {pipeline_mode = #tpu.pipeline_mode<synchronous>, transform_indices = @transform_4, window_bounds = array<i64: 1, 128>}, {pipeline_mode = #tpu.pipeline_mode<synchronous>, transform_indices = @transform_5, window_bounds = array<i64: 128, 128>}, {pipeline_mode = #tpu.pipeline_mode<synchronous>, transform_indices = @transform_6, window_bounds = array<i64: 1, 128>}, {transform_indices = @transform_7, window_bounds = array<i64: 8, 128>}]} {
    %c0 = arith.constant 0 : index
    %c0_0 = arith.constant 0 : index
    %0 = vector.load %arg1[%c0, %c0_0] : memref<8x128xf32, #tpu.memory_space<vmem>>, vector<8x128xf32>
    %c0_1 = arith.constant 0 : index
    %c0_2 = arith.constant 0 : index
    %1 = vector.load %arg2[%c0_1, %c0_2] : memref<128x128xf32, #tpu.memory_space<vmem>>, vector<128x128xf32>
    %cst = arith.constant dense<0.000000e+00> : vector<8x128xf32>
    %2 = tpu.matmul %0, %1, %cst {dimension_numbers = #tpu.dot_dimension_numbers<[1], [0], [0], [1], [0, 0, 1, 1], [], []>} : vector<8x128xf32>, vector<128x128xf32>, vector<8x128xf32> -> vector<8x128xf32>
    %c0_3 = arith.constant 0 : index
    %c0_4 = arith.constant 0 : index
    %3 = vector.load %arg3[%c0_3, %c0_4] : memref<1x128xf32, #tpu.memory_space<vmem>>, vector<1x128xf32>
    %4 = vector.broadcast %3 : vector<1x128xf32> to vector<8x128xf32>
    %5 = arith.addf %2, %4 : vector<8x128xf32>
    %cst_5 = arith.constant 0.000000e+00 : f32
    %6 = vector.broadcast %cst_5 : f32 to vector<8x128xf32>
    %7 = arith.maximumf %5, %6 : vector<8x128xf32>
    %c0_6 = arith.constant 0 : index
    %c0_7 = arith.constant 0 : index
    %8 = vector.load %arg4[%c0_6, %c0_7] : memref<128x128xf32, #tpu.memory_space<vmem>>, vector<128x128xf32>
    %cst_8 = arith.constant dense<0.000000e+00> : vector<8x128xf32>
    %9 = tpu.matmul %7, %8, %cst_8 {dimension_numbers = #tpu.dot_dimension_numbers<[1], [0], [0], [1], [0, 0, 1, 1], [], []>} : vector<8x128xf32>, vector<128x128xf32>, vector<8x128xf32> -> vector<8x128xf32>
    %c0_9 = arith.constant 0 : index
    %c0_10 = arith.constant 0 : index
    %10 = vector.load %arg5[%c0_9, %c0_10] : memref<1x128xf32, #tpu.memory_space<vmem>>, vector<1x128xf32>
    %11 = vector.broadcast %10 : vector<1x128xf32> to vector<8x128xf32>
    %12 = arith.addf %9, %11 : vector<8x128xf32>
    %cst_11 = arith.constant 0.000000e+00 : f32
    %13 = vector.broadcast %cst_11 : f32 to vector<8x128xf32>
    %14 = arith.maximumf %12, %13 : vector<8x128xf32>
    %c0_12 = arith.constant 0 : index
    %c0_13 = arith.constant 0 : index
    %15 = vector.load %arg6[%c0_12, %c0_13] : memref<128x128xf32, #tpu.memory_space<vmem>>, vector<128x128xf32>
    %cst_14 = arith.constant dense<0.000000e+00> : vector<8x128xf32>
    %16 = tpu.matmul %14, %15, %cst_14 {dimension_numbers = #tpu.dot_dimension_numbers<[1], [0], [0], [1], [0, 0, 1, 1], [], []>} : vector<8x128xf32>, vector<128x128xf32>, vector<8x128xf32> -> vector<8x128xf32>
    %c0_15 = arith.constant 0 : index
    %c0_16 = arith.constant 0 : index
    %17 = vector.load %arg7[%c0_15, %c0_16] : memref<1x128xf32, #tpu.memory_space<vmem>>, vector<1x128xf32>
    %18 = vector.broadcast %17 : vector<1x128xf32> to vector<8x128xf32>
    %19 = arith.addf %16, %18 : vector<8x128xf32>
    %c0_17 = arith.constant 0 : index
    %c0_18 = arith.constant 0 : index
    %20 = vector.load %arg8[%c0_17, %c0_18] : memref<8x128xf32, #tpu.memory_space<vmem>>, vector<8x128xf32>
    tpu.vector_store %arg8[%c0_17, %c0_18], %19 {strides = array<i32>} : memref<8x128xf32, #tpu.memory_space<vmem>>, vector<8x128xf32>,
    return
  }
  func.func @transform_0(%arg0: i32) -> (i32, i32) {
    %c0_i32 = arith.constant 0 : i32
    %c0_i32_0 = arith.constant 0 : i32
    return %arg0, %c0_i32 : i32, i32
  }
  func.func @transform_1(%arg0: i32) -> (i32, i32) {
    %c0_i32 = arith.constant 0 : i32
    %c0_i32_0 = arith.constant 0 : i32
    %c0_i32_1 = arith.constant 0 : i32
    return %c0_i32, %c0_i32_0 : i32, i32
  }
  func.func @transform_2(%arg0: i32) -> (i32, i32) {
    %c0_i32 = arith.constant 0 : i32
    %c0_i32_0 = arith.constant 0 : i32
    %c0_i32_1 = arith.constant 0 : i32
    return %c0_i32, %c0_i32_0 : i32, i32
  }
  func.func @transform_3(%arg0: i32) -> (i32, i32) {
    %c0_i32 = arith.constant 0 : i32
    %c0_i32_0 = arith.constant 0 : i32
    %c0_i32_1 = arith.constant 0 : i32
    return %c0_i32, %c0_i32_0 : i32, i32
  }
  func.func @transform_4(%arg0: i32) -> (i32, i32) {
    %c0_i32 = arith.constant 0 : i32
    %c0_i32_0 = arith.constant 0 : i32
    %c0_i32_1 = arith.constant 0 : i32
    return %c0_i32, %c0_i32_0 : i32, i32
  }
  func.func @transform_5(%arg0: i32) -> (i32, i32) {
    %c0_i32 = arith.constant 0 : i32
    %c0_i32_0 = arith.constant 0 : i32
    %c0_i32_1 = arith.constant 0 : i32
    return %c0_i32, %c0_i32_0 : i32, i32
  }
  func.func @transform_6(%arg0: i32) -> (i32, i32) {
    %c0_i32 = arith.constant 0 : i32
    %c0_i32_0 = arith.constant 0 : i32
    %c0_i32_1 = arith.constant 0 : i32
    return %c0_i32, %c0_i32_0 : i32, i32
  }
  func.func @transform_7(%arg0: i32) -> (i32, i32) {
    %c0_i32 = arith.constant 0 : i32
    %c0_i32_0 = arith.constant 0 : i32
    return %arg0, %c0_i32 : i32, i32
  }
}

</mosaic_0001>

<llo_original>
// kernel: tpu_custom_call.1
$region0: #{tpu_custom_call.1}
  #allocation0 [shape = 'u32[]', space=smem, size = 0x4, offset = 0x4, fixed_abs, tag = 'smem constant byte address 0x4 - core index']
  #allocation1 [shape = 'u32[144,128]{1,0:T(1,128)}', space=vmem, size = 0x12000, scoped, tag = 'internal scratch']
  %s0 = inlined_call_operand.hbm [shape: f32[8,128], index: 0, kind: input, shape index: {}]
  %s1 = inlined_call_operand.hbm [shape: f32[128,128], index: 1, kind: input, shape index: {}]
  %s2 = inlined_call_operand.vmem [shape: f32[1,128], index: 2, kind: input, shape index: {}]
  %s3 = inlined_call_operand.hbm [shape: f32[128,128], index: 3, kind: input, shape index: {}]
  %s4 = inlined_call_operand.vmem [shape: f32[1,128], index: 4, kind: input, shape index: {}]
  %s5 = inlined_call_operand.hbm [shape: f32[128,128], index: 5, kind: input, shape index: {}]
  %s6 = inlined_call_operand.vmem [shape: f32[1,128], index: 6, kind: input, shape index: {}]
  %s7 = inlined_call_operand.hbm [shape: f32[8,128], index: 7, kind: output, shape index: {}]
  %s8 = sld [smem:[#allocation0]]
  $region54: #{tpu_custom_call.1} parent=0
    _
  %s10 = ssub.s32 1, %s8
  %s11 = scalar_select 0, %s10, %s8
  $region1: #{tpu_custom_call.1} parent=0
    #allocation2 [shape = 'u8[4096]{0}', space=vmem, size = 0x1000, scoped, tag = 'input window, operand 0, single buffered']
    #allocation3 [shape = 's32[1]{0}', space=sflag, size = 0x4, scoped, tag = 'scoped memory for tpu_custom_call.1']
    #allocation4 [shape = 's32[1]{0}', space=sflag, size = 0x4, scoped, tag = 'scoped memory for tpu_custom_call.1']
    #allocation5 [shape = 'u8[65536]{0}', space=vmem, size = 0x10000, scoped, tag = 'input window, operand 1, single buffered']
    #allocation6 [shape = 's32[1]{0}', space=sflag, size = 0x4, scoped, tag = 'scoped memory for tpu_custom_call.1']
    #allocation7 [shape = 'u8[65536]{0}', space=vmem, size = 0x10000, scoped, tag = 'input window, operand 3, single buffered']
    #allocation8 [shape = 'u8[65536]{0}', space=vmem, size = 0x10000, scoped, tag = 'input window, operand 5, single buffered']
    #allocation9 [shape = 's32[1]{0}', space=sflag, size = 0x4, scoped, tag = 'scoped memory for tpu_custom_call.1']
    #allocation10 [shape = 'u8[4096]{0}', space=vmem, size = 0x1000, scoped, tag = 'output window, operand 0, single buffered']
    %12 = vsyncpa [#allocation3], 0
    %13 = vsyncpa [#allocation6], 0
    %14 = vsyncpa [#allocation9], 0
    %15 = vsyncpa [#allocation4], 0
    // Predicated region
    $region2: #{tpu_custom_call.1} parent=1 // pred_check
      _
    $region3: #{tpu_custom_call.1} parent=1 // pred_check_branch
      %17 = sbr.rel (0) target = $region5
    $region4: #{tpu_custom_call.1} parent=1 // pred_region
      %s19 = ssub.s32 128, 128
      %20 = vsyncadd [#allocation3], %s19
      %s22 = sshll.u32 [#allocation2], 4
      %s23 = int_to_ptr.vmem [resolvable:$true] %s22
      %25 = dma.hbm_to_vmem [thread:$0]  %s0, 128, %s23, [#allocation3]
    $region5: #{tpu_custom_call.1} parent=1 // pred_fallthru
      _
    // Predicated region
    $region6: #{tpu_custom_call.1} parent=1 // pred_check
      _
    $region7: #{tpu_custom_call.1} parent=1 // pred_check_branch
      %27 = sbr.rel (0) target = $region9
    $region8: #{tpu_custom_call.1} parent=1 // pred_region
      %s29 = ssub.s32 2048, 2048
      %30 = vsyncadd [#allocation6], %s29
      %s31 = sshll.u32 [#allocation5], 4
      %s32 = int_to_ptr.vmem [resolvable:$true] %s31
      %37 = dma.hbm_to_vmem [thread:$0]  %s1, 2048, %s32, [#allocation6], 128, 128, 8
    $region9: #{tpu_custom_call.1} parent=1 // pred_fallthru
      _
    // Predicated region
    $region10: #{tpu_custom_call.1} parent=1 // pred_check
      _
    $region11: #{tpu_custom_call.1} parent=1 // pred_check_branch
      %39 = sbr.rel (0) target = $region13
    $region12: #{tpu_custom_call.1} parent=1 // pred_region
      _
    $region13: #{tpu_custom_call.1} parent=1 // pred_fallthru
      _
    // Predicated region
    $region14: #{tpu_custom_call.1} parent=1 // pred_check
      _
    $region15: #{tpu_custom_call.1} parent=1 // pred_check_branch
      %41 = sbr.rel (0) target = $region17
    $region16: #{tpu_custom_call.1} parent=1 // pred_region
      %s43 = ssub.s32 2048, 2048
      %44 = vsyncadd [#allocation6], %s43
      %s45 = sshll.u32 [#allocation7], 4
      %s46 = int_to_ptr.vmem [resolvable:$true] %s45
      %51 = dma.hbm_to_vmem [thread:$0]  %s3, 2048, %s46, [#allocation6], 128, 128, 8
    $region17: #{tpu_custom_call.1} parent=1 // pred_fallthru
      _
    // Predicated region
    $region18: #{tpu_custom_call.1} parent=1 // pred_check
      _
    $region19: #{tpu_custom_call.1} parent=1 // pred_check_branch
      %53 = sbr.rel (0) target = $region21
    $region20: #{tpu_custom_call.1} parent=1 // pred_region
      _
    $region21: #{tpu_custom_call.1} parent=1 // pred_fallthru
      _
    // Predicated region
    $region22: #{tpu_custom_call.1} parent=1 // pred_check
      _
    $region23: #{tpu_custom_call.1} parent=1 // pred_check_branch
      %55 = sbr.rel (0) target = $region25
    $region24: #{tpu_custom_call.1} parent=1 // pred_region
      %s57 = ssub.s32 2048, 2048
      %58 = vsyncadd [#allocation9], %s57
      %s59 = sshll.u32 [#allocation8], 4
      %s60 = int_to_ptr.vmem [resolvable:$true] %s59
      %65 = dma.hbm_to_vmem [thread:$0]  %s5, 2048, %s60, [#allocation9], 128, 128, 8
    $region25: #{tpu_custom_call.1} parent=1 // pred_fallthru
      _
    // Predicated region
    $region26: #{tpu_custom_call.1} parent=1 // pred_check
      _
    $region27: #{tpu_custom_call.1} parent=1 // pred_check_branch
      %67 = sbr.rel (0) target = $region29
    $region28: #{tpu_custom_call.1} parent=1 // pred_region
      _
    $region29: #{tpu_custom_call.1} parent=1 // pred_fallthru
      _
    // Predicated region
    $region30: #{tpu_custom_call.1} parent=1 // pred_check
      _
    $region31: #{tpu_custom_call.1} parent=1 // pred_check_branch
      %69 = sbr.rel (0) target = $region33
    $region32: #{tpu_custom_call.1} parent=1 // pred_region
      %70 = dma.done [#allocation3], 128
    $region33: #{tpu_custom_call.1} parent=1 // pred_fallthru
      _
    // Predicated region
    $region34: #{tpu_custom_call.1} parent=1 // pred_check
      _
    $region35: #{tpu_custom_call.1} parent=1 // pred_check_branch
      %72 = sbr.rel (0) target = $region37
    $region36: #{tpu_custom_call.1} parent=1 // pred_region
      %73 = dma.done [#allocation6], 2048
    $region37: #{tpu_custom_call.1} parent=1 // pred_fallthru
      _
    // Predicated region
    $region38: #{tpu_custom_call.1} parent=1 // pred_check
      _
    $region39: #{tpu_custom_call.1} parent=1 // pred_check_branch
      %75 = sbr.rel (0) target = $region41
    $region40: #{tpu_custom_call.1} parent=1 // pred_region
      %76 = dma.done [#allocation6], 2048
    $region41: #{tpu_custom_call.1} parent=1 // pred_fallthru
      _
    // Predicated region
    $region42: #{tpu_custom_call.1} parent=1 // pred_check
      _
    $region43: #{tpu_custom_call.1} parent=1 // pred_check_branch
      %78 = sbr.rel (0) target = $region45
    $region44: #{tpu_custom_call.1} parent=1 // pred_region
      %79 = dma.done [#allocation9], 2048
    $region45: #{tpu_custom_call.1} parent=1 // pred_fallthru
      _
    %v80 = vld [vmem:[#allocation2] sm:$0xff]
    %v81 = vld [vmem:[#allocation5] sm:$0xff]
    %v82 = vld [vmem:[#allocation5 + $0x8] sm:$0xff]
    %v83 = vld [vmem:[#allocation5 + $0x10] sm:$0xff]
    %v84 = vld [vmem:[#allocation5 + $0x18] sm:$0xff]
    %v85 = vld [vmem:[#allocation5 + $0x20] sm:$0xff]
    %v86 = vld [vmem:[#allocation5 + $0x28] sm:$0xff]
    %v87 = vld [vmem:[#allocation5 + $0x30] sm:$0xff]
    %v88 = vld [vmem:[#allocation5 + $0x38] sm:$0xff]
    %v89 = vld [vmem:[#allocation5 + $0x40] sm:$0xff]
    %v90 = vld [vmem:[#allocation5 + $0x48] sm:$0xff]
    %v91 = vld [vmem:[#allocation5 + $0x50] sm:$0xff]
    %v92 = vld [vmem:[#allocation5 + $0x58] sm:$0xff]
    %v93 = vld [vmem:[#allocation5 + $0x60] sm:$0xff]
    %v94 = vld [vmem:[#allocation5 + $0x68] sm:$0xff]
    %v95 = vld [vmem:[#allocation5 + $0x70] sm:$0xff]
    %v96 = vld [vmem:[#allocation5 + $0x78] sm:$0xff]
    %v97 = vld [vmem:[%s2] sm:$0x1]
    %v99 = vlaneseq
    %v100 = vshrl.u32 %v99, 7
    %v101 = vsub.s32 0, %v100
    %v102 = vrot.slane %v97, %v101
    %104 = vmatprep.subr.mxu0 0.0
    %105 = vmatpush1.msra.mxu0 %v81
    %106 = vmatprep.subr.mxu0 0.0
    %107 = vmatpush1.msra.mxu0 %v82
    %108 = vmatprep.subr.mxu0 0.0
    %109 = vmatpush1.msra.mxu0 %v83
    %110 = vmatprep.subr.mxu0 0.0
    %111 = vmatpush1.msra.mxu0 %v84
    %112 = vmatprep.subr.mxu0 0.0
    %113 = vmatpush1.msra.mxu0 %v85
    %114 = vmatprep.subr.mxu0 0.0
    %115 = vmatpush1.msra.mxu0 %v86
    %116 = vmatprep.subr.mxu0 0.0
    %117 = vmatpush1.msra.mxu0 %v87
    %118 = vmatprep.subr.mxu0 0.0
    %119 = vmatpush1.msra.mxu0 %v88
    %120 = vmatprep.subr.mxu0 0.0
    %121 = vmatpush1.msra.mxu0 %v89
    %122 = vmatprep.subr.mxu0 0.0
    %123 = vmatpush1.msra.mxu0 %v90
    %124 = vmatprep.subr.mxu0 0.0
    %125 = vmatpush1.msra.mxu0 %v91
    %126 = vmatprep.subr.mxu0 0.0
    %127 = vmatpush1.msra.mxu0 %v92
    %128 = vmatprep.subr.mxu0 0.0
    %129 = vmatpush1.msra.mxu0 %v93
    %130 = vmatprep.subr.mxu0 0.0
    %131 = vmatpush1.msra.mxu0 %v94
    %132 = vmatprep.subr.mxu0 0.0
    %133 = vmatpush1.msra.mxu0 %v95
    %134 = vmatprep.subr.mxu0 0.0
    %135 = vmatpush1.msra.mxu0 %v96
    %136 = vmatprep.subr.mxu0 0.0
    %137 = vmatpush1.msra.mxu0 0.0
    %138 = vmatprep.subr.mxu0 0.0
    %139 = vmatpush1.msra.mxu0 0.0
    %140 = vmatprep.subr.mxu0 0.0
    %141 = vmatpush1.msra.mxu0 0.0
    %142 = vmatprep.subr.mxu0 0.0
    %143 = vmatpush1.msra.mxu0 0.0
    %144 = vmatprep.subr.mxu0 0.0
    %145 = vmatpush1.msra.mxu0 0.0
    %146 = vmatprep.subr.mxu0 0.0
    %147 = vmatpush1.msra.mxu0 0.0
    %148 = vmatprep.subr.mxu0 0.0
    %149 = vmatpush1.msra.mxu0 0.0
    %150 = vmatprep.subr.mxu0 0.0
    %151 = vmatpush1.msra.mxu0 0.0
    %152 = vmatprep.subr.mxu0 0.0
    %153 = vmatpush1.msra.mxu0 0.0
    %154 = vmatprep.subr.mxu0 0.0
    %155 = vmatpush1.msra.mxu0 0.0
    %156 = vmatprep.subr.mxu0 0.0
    %157 = vmatpush1.msra.mxu0 0.0
    %158 = vmatprep.subr.mxu0 0.0
    %159 = vmatpush1.msra.mxu0 0.0
    %160 = vmatprep.subr.mxu0 0.0
    %161 = vmatpush1.msra.mxu0 0.0
    %162 = vmatprep.subr.mxu0 0.0
    %163 = vmatpush1.msra.mxu0 0.0
    %164 = vmatprep.subr.mxu0 0.0
    %165 = vmatpush1.msra.mxu0 0.0
    %166 = vmatprep.subr.mxu0 0.0
    %167 = vmatpush1.msra.mxu0 0.0
    %168 = vmatprep.mubr.f32.mxu0 0.0
    %169 = vmatmul.mubr.f32.gmra.mrb[0].mxu0 %v80
    %v170 = vpop.f32.mrb[0].mxu0
    %v171 = vadd.f32 %v102, %v170
    %v172 = vpop.f32.mrb[0].mxu0
    %173 = vdwg.mxu0
    %v174 = vmax.f32 %v171, 0.0
    %v175 = vld [vmem:[#allocation7] sm:$0xff]
    %v176 = vld [vmem:[#allocation7 + $0x8] sm:$0xff]
    %v177 = vld [vmem:[#allocation7 + $0x10] sm:$0xff]
    %v178 = vld [vmem:[#allocation7 + $0x18] sm:$0xff]
    %v179 = vld [vmem:[#allocation7 + $0x20] sm:$0xff]
    %v180 = vld [vmem:[#allocation7 + $0x28] sm:$0xff]
    %v181 = vld [vmem:[#allocation7 + $0x30] sm:$0xff]
    %v182 = vld [vmem:[#allocation7 + $0x38] sm:$0xff]
    %v183 = vld [vmem:[#allocation7 + $0x40] sm:$0xff]
    %v184 = vld [vmem:[#allocation7 + $0x48] sm:$0xff]
    %v185 = vld [vmem:[#allocation7 + $0x50] sm:$0xff]
    %v186 = vld [vmem:[#allocation7 + $0x58] sm:$0xff]
    %v187 = vld [vmem:[#allocation7 + $0x60] sm:$0xff]
    %v188 = vld [vmem:[#allocation7 + $0x68] sm:$0xff]
    %v189 = vld [vmem:[#allocation7 + $0x70] sm:$0xff]
    %v190 = vld [vmem:[#allocation7 + $0x78] sm:$0xff]
    %v191 = vld [vmem:[%s4] sm:$0x1]
    %v193 = vlaneseq
    %v194 = vshrl.u32 %v193, 7
    %v195 = vsub.s32 0, %v194
    %v196 = vrot.slane %v191, %v195
    %198 = vmatprep.subr.mxu0 0.0
    %199 = vmatpush1.msra.mxu0 %v175
    %200 = vmatprep.subr.mxu0 0.0
    %201 = vmatpush1.msra.mxu0 %v176
    %202 = vmatprep.subr.mxu0 0.0
    %203 = vmatpush1.msra.mxu0 %v177
    %204 = vmatprep.subr.mxu0 0.0
    %205 = vmatpush1.msra.mxu0 %v178
    %206 = vmatprep.subr.mxu0 0.0
    %207 = vmatpush1.msra.mxu0 %v179
    %208 = vmatprep.subr.mxu0 0.0
    %209 = vmatpush1.msra.mxu0 %v180
    %210 = vmatprep.subr.mxu0 0.0
    %211 = vmatpush1.msra.mxu0 %v181
    %212 = vmatprep.subr.mxu0 0.0
    %213 = vmatpush1.msra.mxu0 %v182
    %214 = vmatprep.subr.mxu0 0.0
    %215 = vmatpush1.msra.mxu0 %v183
    %216 = vmatprep.subr.mxu0 0.0
    %217 = vmatpush1.msra.mxu0 %v184
    %218 = vmatprep.subr.mxu0 0.0
    %219 = vmatpush1.msra.mxu0 %v185
    %220 = vmatprep.subr.mxu0 0.0
    %221 = vmatpush1.msra.mxu0 %v186
    %222 = vmatprep.subr.mxu0 0.0
    %223 = vmatpush1.msra.mxu0 %v187
    %224 = vmatprep.subr.mxu0 0.0
    %225 = vmatpush1.msra.mxu0 %v188
    %226 = vmatprep.subr.mxu0 0.0
    %227 = vmatpush1.msra.mxu0 %v189
    %228 = vmatprep.subr.mxu0 0.0
    %229 = vmatpush1.msra.mxu0 %v190
    %230 = vmatprep.subr.mxu0 0.0
    %231 = vmatpush1.msra.mxu0 0.0
    %232 = vmatprep.subr.mxu0 0.0
    %233 = vmatpush1.msra.mxu0 0.0
    %234 = vmatprep.subr.mxu0 0.0
    %235 = vmatpush1.msra.mxu0 0.0
    %236 = vmatprep.subr.mxu0 0.0
    %237 = vmatpush1.msra.mxu0 0.0
    %238 = vmatprep.subr.mxu0 0.0
    %239 = vmatpush1.msra.mxu0 0.0
    %240 = vmatprep.subr.mxu0 0.0
    %241 = vmatpush1.msra.mxu0 0.0
    %242 = vmatprep.subr.mxu0 0.0
    %243 = vmatpush1.msra.mxu0 0.0
    %244 = vmatprep.subr.mxu0 0.0
    %245 = vmatpush1.msra.mxu0 0.0
    %246 = vmatprep.subr.mxu0 0.0
    %247 = vmatpush1.msra.mxu0 0.0
    %248 = vmatprep.subr.mxu0 0.0
    %249 = vmatpush1.msra.mxu0 0.0
    %250 = vmatprep.subr.mxu0 0.0
    %251 = vmatpush1.msra.mxu0 0.0
    %252 = vmatprep.subr.mxu0 0.0
    %253 = vmatpush1.msra.mxu0 0.0
    %254 = vmatprep.subr.mxu0 0.0
    %255 = vmatpush1.msra.mxu0 0.0
    %256 = vmatprep.subr.mxu0 0.0
    %257 = vmatpush1.msra.mxu0 0.0
    %258 = vmatprep.subr.mxu0 0.0
    %259 = vmatpush1.msra.mxu0 0.0
    %260 = vmatprep.subr.mxu0 0.0
    %261 = vmatpush1.msra.mxu0 0.0
    %262 = vmatprep.mubr.f32.mxu0 0.0
    %263 = vmatmul.mubr.f32.gmra.mrb[0].mxu0 %v174
    %v264 = vpop.f32.mrb[0].mxu0
    %v265 = vadd.f32 %v196, %v264
    %v266 = vpop.f32.mrb[0].mxu0
    %267 = vdwg.mxu0
    %v268 = vmax.f32 %v265, 0.0
    %v269 = vld [vmem:[#allocation8] sm:$0xff]
    %v270 = vld [vmem:[#allocation8 + $0x8] sm:$0xff]
    %v271 = vld [vmem:[#allocation8 + $0x10] sm:$0xff]
    %v272 = vld [vmem:[#allocation8 + $0x18] sm:$0xff]
    %v273 = vld [vmem:[#allocation8 + $0x20] sm:$0xff]
    %v274 = vld [vmem:[#allocation8 + $0x28] sm:$0xff]
    %v275 = vld [vmem:[#allocation8 + $0x30] sm:$0xff]
    %v276 = vld [vmem:[#allocation8 + $0x38] sm:$0xff]
    %v277 = vld [vmem:[#allocation8 + $0x40] sm:$0xff]
    %v278 = vld [vmem:[#allocation8 + $0x48] sm:$0xff]
    %v279 = vld [vmem:[#allocation8 + $0x50] sm:$0xff]
    %v280 = vld [vmem:[#allocation8 + $0x58] sm:$0xff]
    %v281 = vld [vmem:[#allocation8 + $0x60] sm:$0xff]
    %v282 = vld [vmem:[#allocation8 + $0x68] sm:$0xff]
    %v283 = vld [vmem:[#allocation8 + $0x70] sm:$0xff]
    %v284 = vld [vmem:[#allocation8 + $0x78] sm:$0xff]
    %v285 = vld [vmem:[%s6] sm:$0x1]
    %v287 = vlaneseq
    %v288 = vshrl.u32 %v287, 7
    %v289 = vsub.s32 0, %v288
    %v290 = vrot.slane %v285, %v289
    %292 = vmatprep.subr.mxu0 0.0
    %293 = vmatpush1.msra.mxu0 %v269
    %294 = vmatprep.subr.mxu0 0.0
    %295 = vmatpush1.msra.mxu0 %v270
    %296 = vmatprep.subr.mxu0 0.0
    %297 = vmatpush1.msra.mxu0 %v271
    %298 = vmatprep.subr.mxu0 0.0
    %299 = vmatpush1.msra.mxu0 %v272
    %300 = vmatprep.subr.mxu0 0.0
    %301 = vmatpush1.msra.mxu0 %v273
    %302 = vmatprep.subr.mxu0 0.0
    %303 = vmatpush1.msra.mxu0 %v274
    %304 = vmatprep.subr.mxu0 0.0
    %305 = vmatpush1.msra.mxu0 %v275
    %306 = vmatprep.subr.mxu0 0.0
    %307 = vmatpush1.msra.mxu0 %v276
    %308 = vmatprep.subr.mxu0 0.0
    %309 = vmatpush1.msra.mxu0 %v277
    %310 = vmatprep.subr.mxu0 0.0
    %311 = vmatpush1.msra.mxu0 %v278
    %312 = vmatprep.subr.mxu0 0.0
    %313 = vmatpush1.msra.mxu0 %v279
    %314 = vmatprep.subr.mxu0 0.0
    %315 = vmatpush1.msra.mxu0 %v280
    %316 = vmatprep.subr.mxu0 0.0
    %317 = vmatpush1.msra.mxu0 %v281
    %318 = vmatprep.subr.mxu0 0.0
    %319 = vmatpush1.msra.mxu0 %v282
    %320 = vmatprep.subr.mxu0 0.0
    %321 = vmatpush1.msra.mxu0 %v283
    %322 = vmatprep.subr.mxu0 0.0
    %323 = vmatpush1.msra.mxu0 %v284
    %324 = vmatprep.subr.mxu0 0.0
    %325 = vmatpush1.msra.mxu0 0.0
    %326 = vmatprep.subr.mxu0 0.0
    %327 = vmatpush1.msra.mxu0 0.0
    %328 = vmatprep.subr.mxu0 0.0
    %329 = vmatpush1.msra.mxu0 0.0
    %330 = vmatprep.subr.mxu0 0.0
    %331 = vmatpush1.msra.mxu0 0.0
    %332 = vmatprep.subr.mxu0 0.0
    %333 = vmatpush1.msra.mxu0 0.0
    %334 = vmatprep.subr.mxu0 0.0
    %335 = vmatpush1.msra.mxu0 0.0
    %336 = vmatprep.subr.mxu0 0.0
    %337 = vmatpush1.msra.mxu0 0.0
    %338 = vmatprep.subr.mxu0 0.0
    %339 = vmatpush1.msra.mxu0 0.0
    %340 = vmatprep.subr.mxu0 0.0
    %341 = vmatpush1.msra.mxu0 0.0
    %342 = vmatprep.subr.mxu0 0.0
    %343 = vmatpush1.msra.mxu0 0.0
    %344 = vmatprep.subr.mxu0 0.0
    %345 = vmatpush1.msra.mxu0 0.0
    %346 = vmatprep.subr.mxu0 0.0
    %347 = vmatpush1.msra.mxu0 0.0
    %348 = vmatprep.subr.mxu0 0.0
    %349 = vmatpush1.msra.mxu0 0.0
    %350 = vmatprep.subr.mxu0 0.0
    %351 = vmatpush1.msra.mxu0 0.0
    %352 = vmatprep.subr.mxu0 0.0
    %353 = vmatpush1.msra.mxu0 0.0
    %354 = vmatprep.subr.mxu0 0.0
    %355 = vmatpush1.msra.mxu0 0.0
    %356 = vmatprep.mubr.f32.mxu0 0.0
    %357 = vmatmul.mubr.f32.gmra.mrb[0].mxu0 %v268
    %v358 = vpop.f32.mrb[0].mxu0
    %v359 = vadd.f32 %v290, %v358
    %v360 = vpop.f32.mrb[0].mxu0
    %361 = vdwg.mxu0
    %362 = vst [vmem:[#allocation10] sm:$0xff] %v359
    // Predicated region
    $region46: #{tpu_custom_call.1} parent=1 // pred_check
      _
    $region47: #{tpu_custom_call.1} parent=1 // pred_check_branch
      %364 = sbr.rel (0) target = $region49
    $region48: #{tpu_custom_call.1} parent=1 // pred_region
      %s366 = ssub.s32 128, 128
      %367 = vsyncadd [#allocation4], %s366
      %s369 = sshll.u32 [#allocation10], 4
      %s370 = int_to_ptr.vmem [resolvable:$true] %s369
      %372 = dma.vmem_to_hbm [thread:$0]  %s370, 128, %s7, [#allocation4]
    $region49: #{tpu_custom_call.1} parent=1 // pred_fallthru
      _
    // Predicated region
    $region50: #{tpu_custom_call.1} parent=1 // pred_check
      _
    $region51: #{tpu_custom_call.1} parent=1 // pred_check_branch
      %374 = sbr.rel (0) target = $region53
    $region52: #{tpu_custom_call.1} parent=1 // pred_region
      %375 = dma.done [#allocation4], 128
    $region53: #{tpu_custom_call.1} parent=1 // pred_fallthru
      _
    %376 = vsyncpa [#allocation3], 1
    %377 = vsyncpa [#allocation6], 1
    %378 = vsyncpa [#allocation9], 1
    %379 = vsyncpa [#allocation4], 1

// kernel: tpu_custom_call.1
$region0: #{tpu_custom_call.1}
  #allocation0 [shape = 'u32[]', space=smem, size = 0x4, offset = 0x4, fixed_abs, tag = 'smem constant byte address 0x4 - core index']
  #allocation1 [shape = 'u32[144,128]{1,0:T(1,128)}', space=vmem, size = 0x12000, scoped, tag = 'internal scratch']
  %s0 = inlined_call_operand.hbm [shape: f32[8,128], index: 0, kind: input, shape index: {}]
  %s1 = inlined_call_operand.hbm [shape: f32[128,128], index: 1, kind: input, shape index: {}]
  %s2 = inlined_call_operand.vmem [shape: f32[1,128], index: 2, kind: input, shape index: {}]
  %s3 = inlined_call_operand.hbm [shape: f32[128,128], index: 3, kind: input, shape index: {}]
  %s4 = inlined_call_operand.vmem [shape: f32[1,128], index: 4, kind: input, shape index: {}]
  %s5 = inlined_call_operand.hbm [shape: f32[128,128], index: 5, kind: input, shape index: {}]
  %s6 = inlined_call_operand.vmem [shape: f32[1,128], index: 6, kind: input, shape index: {}]
  %s7 = inlined_call_operand.hbm [shape: f32[8,128], index: 7, kind: output, shape index: {}]
  %s8 = sld [smem:[#allocation0]]
  $region54: #{tpu_custom_call.1} parent=0
    _
  %s10 = ssub.s32 1, %s8
  %s11 = scalar_select 0, %s10, %s8
  $region1: #{tpu_custom_call.1} parent=0
    #allocation2 [shape = 'u8[4096]{0}', space=vmem, size = 0x1000, scoped, tag = 'input window, operand 0, single buffered']
    #allocation3 [shape = 's32[1]{0}', space=sflag, size = 0x4, scoped, tag = 'scoped memory for tpu_custom_call.1']
    #allocation4 [shape = 's32[1]{0}', space=sflag, size = 0x4, scoped, tag = 'scoped memory for tpu_custom_call.1']
    #allocation5 [shape = 'u8[65536]{0}', space=vmem, size = 0x10000, scoped, tag = 'input window, operand 1, single buffered']
    #allocation6 [shape = 's32[1]{0}', space=sflag, size = 0x4, scoped, tag = 'scoped memory for tpu_custom_call.1']
    #allocation7 [shape = 'u8[65536]{0}', space=vmem, size = 0x10000, scoped, tag = 'input window, operand 3, single buffered']
    #allocation8 [shape = 'u8[65536]{0}', space=vmem, size = 0x10000, scoped, tag = 'input window, operand 5, single buffered']
    #allocation9 [shape = 's32[1]{0}', space=sflag, size = 0x4, scoped, tag = 'scoped memory for tpu_custom_call.1']
    #allocation10 [shape = 'u8[4096]{0}', space=vmem, size = 0x1000, scoped, tag = 'output window, operand 0, single buffered']
    %12 = vsyncpa [#allocation3], 0
    %13 = vsyncpa [#allocation6], 0
    %14 = vsyncpa [#allocation9], 0
    %15 = vsyncpa [#allocation4], 0
    // Predicated region
    $region2: #{tpu_custom_call.1} parent=1 // pred_check
      _
    $region3: #{tpu_custom_call.1} parent=1 // pred_check_branch
      %17 = sbr.rel (0) target = $region5
    $region4: #{tpu_custom_call.1} parent=1 // pred_region
      %s19 = ssub.s32 128, 128
      %20 = vsyncadd [#allocation3], %s19
      %s22 = sshll.u32 [#allocation2], 4
      %s23 = int_to_ptr.vmem [resolvable:$true] %s22
      %25 = dma.hbm_to_vmem [thread:$0]  %s0, 128, %s23, [#allocation3]
    $region5: #{tpu_custom_call.1} parent=1 // pred_fallthru
      _
    // Predicated region
    $region6: #{tpu_custom_call.1} parent=1 // pred_check
      _
    $region7: #{tpu_custom_call.1} parent=1 // pred_check_branch
      %27 = sbr.rel (0) target = $region9
    $region8: #{tpu_custom_call.1} parent=1 // pred_region
      %s29 = ssub.s32 2048, 2048
      %30 = vsyncadd [#allocation6], %s29
      %s31 = sshll.u32 [#allocation5], 4
      %s32 = int_to_ptr.vmem [resolvable:$true] %s31
      %37 = dma.hbm_to_vmem [thread:$0]  %s1, 2048, %s32, [#allocation6], 128, 128, 8
    $region9: #{tpu_custom_call.1} parent=1 // pred_fallthru
      _
    // Predicated region
    $region10: #{tpu_custom_call.1} parent=1 // pred_check
      _
    $region11: #{tpu_custom_call.1} parent=1 // pred_check_branch
      %39 = sbr.rel (0) target = $region13
    $region12: #{tpu_custom_call.1} parent=1 // pred_region
      _
    $region13: #{tpu_custom_call.1} parent=1 // pred_fallthru
      _
    // Predicated region
    $region14: #{tpu_custom_call.1} parent=1 // pred_check
      _
    $region15: #{tpu_custom_call.1} parent=1 // pred_check_branch
      %41 = sbr.rel (0) target = $region17
    $region16: #{tpu_custom_call.1} parent=1 // pred_region
      %s43 = ssub.s32 2048, 2048
      %44 = vsyncadd [#allocation6], %s43
      %s45 = sshll.u32 [#allocation7], 4
      %s46 = int_to_ptr.vmem [resolvable:$true] %s45
      %51 = dma.hbm_to_vmem [thread:$0]  %s3, 2048, %s46, [#allocation6], 128, 128, 8
    $region17: #{tpu_custom_call.1} parent=1 // pred_fallthru
      _
    // Predicated region
    $region18: #{tpu_custom_call.1} parent=1 // pred_check
      _
    $region19: #{tpu_custom_call.1} parent=1 // pred_check_branch
      %53 = sbr.rel (0) target = $region21
    $region20: #{tpu_custom_call.1} parent=1 // pred_region
      _
    $region21: #{tpu_custom_call.1} parent=1 // pred_fallthru
      _
    // Predicated region
    $region22: #{tpu_custom_call.1} parent=1 // pred_check
      _
    $region23: #{tpu_custom_call.1} parent=1 // pred_check_branch
      %55 = sbr.rel (0) target = $region25
    $region24: #{tpu_custom_call.1} parent=1 // pred_region
      %s57 = ssub.s32 2048, 2048
      %58 = vsyncadd [#allocation9], %s57
      %s59 = sshll.u32 [#allocation8], 4
      %s60 = int_to_ptr.vmem [resolvable:$true] %s59
      %65 = dma.hbm_to_vmem [thread:$0]  %s5, 2048, %s60, [#allocation9], 128, 128, 8
    $region25: #{tpu_custom_call.1} parent=1 // pred_fallthru
      _
    // Predicated region
    $region26: #{tpu_custom_call.1} parent=1 // pred_check
      _
    $region27: #{tpu_custom_call.1} parent=1 // pred_check_branch
      %67 = sbr.rel (0) target = $region29
    $region28: #{tpu_custom_call.1} parent=1 // pred_region
      _
    $region29: #{tpu_custom_call.1} parent=1 // pred_fallthru
      _
    // Predicated region
    $region30: #{tpu_custom_call.1} parent=1 // pred_check
      _
    $region31: #{tpu_custom_call.1} parent=1 // pred_check_branch
      %69 = sbr.rel (0) target = $region33
    $region32: #{tpu_custom_call.1} parent=1 // pred_region
      %70 = dma.done [#allocation3], 128
    $region33: #{tpu_custom_call.1} parent=1 // pred_fallthru
      _
    // Predicated region
    $region34: #{tpu_custom_call.1} parent=1 // pred_check
      _
    $region35: #{tpu_custom_call.1} parent=1 // pred_check_branch
      %72 = sbr.rel (0) target = $region37
    $region36: #{tpu_custom_call.1} parent=1 // pred_region
      %73 = dma.done [#allocation6], 2048
    $region37: #{tpu_custom_call.1} parent=1 // pred_fallthru
      _
    // Predicated region
    $region38: #{tpu_custom_call.1} parent=1 // pred_check
      _
    $region39: #{tpu_custom_call.1} parent=1 // pred_check_branch
      %75 = sbr.rel (0) target = $region41
    $region40: #{tpu_custom_call.1} parent=1 // pred_region
      %76 = dma.done [#allocation6], 2048
    $region41: #{tpu_custom_call.1} parent=1 // pred_fallthru
      _
    // Predicated region
    $region42: #{tpu_custom_call.1} parent=1 // pred_check
      _
    $region43: #{tpu_custom_call.1} parent=1 // pred_check_branch
      %78 = sbr.rel (0) target = $region45
    $region44: #{tpu_custom_call.1} parent=1 // pred_region
      %79 = dma.done [#allocation9], 2048
    $region45: #{tpu_custom_call.1} parent=1 // pred_fallthru
      _
    %v80 = vld [vmem:[#allocation2] sm:$0xff]
    %v81 = vld [vmem:[#allocation5] sm:$0xff]
    %v82 = vld [vmem:[#allocation5 + $0x8] sm:$0xff]
    %v83 = vld [vmem:[#allocation5 + $0x10] sm:$0xff]
    %v84 = vld [vmem:[#allocation5 + $0x18] sm:$0xff]
    %v85 = vld [vmem:[#allocation5 + $0x20] sm:$0xff]
    %v86 = vld [vmem:[#allocation5 + $0x28] sm:$0xff]
    %v87 = vld [vmem:[#allocation5 + $0x30] sm:$0xff]
    %v88 = vld [vmem:[#allocation5 + $0x38] sm:$0xff]
    %v89 = vld [vmem:[#allocation5 + $0x40] sm:$0xff]
    %v90 = vld [vmem:[#allocation5 + $0x48] sm:$0xff]
    %v91 = vld [vmem:[#allocation5 + $0x50] sm:$0xff]
    %v92 = vld [vmem:[#allocation5 + $0x58] sm:$0xff]
    %v93 = vld [vmem:[#allocation5 + $0x60] sm:$0xff]
    %v94 = vld [vmem:[#allocation5 + $0x68] sm:$0xff]
    %v95 = vld [vmem:[#allocation5 + $0x70] sm:$0xff]
    %v96 = vld [vmem:[#allocation5 + $0x78] sm:$0xff]
    %v97 = vld [vmem:[%s2] sm:$0x1]
    %v99 = vlaneseq
    %v100 = vshrl.u32 %v99, 7
    %v101 = vsub.s32 0, %v100
    %v102 = vrot.slane %v97, %v101
    %104 = vmatprep.subr.mxu0 0.0
    %105 = vmatpush1.msra.mxu0 %v81
    %106 = vmatprep.subr.mxu0 0.0
    %107 = vmatpush1.msra.mxu0 %v82
    %108 = vmatprep.subr.mxu0 0.0
    %109 = vmatpush1.msra.mxu0 %v83
    %110 = vmatprep.subr.mxu0 0.0
    %111 = vmatpush1.msra.mxu0 %v84
    %112 = vmatprep.subr.mxu0 0.0
    %113 = vmatpush1.msra.mxu0 %v85
    %114 = vmatprep.subr.mxu0 0.0
    %115 = vmatpush1.msra.mxu0 %v86
    %116 = vmatprep.subr.mxu0 0.0
    %117 = vmatpush1.msra.mxu0 %v87
    %118 = vmatprep.subr.mxu0 0.0
    %119 = vmatpush1.msra.mxu0 %v88
    %120 = vmatprep.subr.mxu0 0.0
    %121 = vmatpush1.msra.mxu0 %v89
    %122 = vmatprep.subr.mxu0 0.0
    %123 = vmatpush1.msra.mxu0 %v90
    %124 = vmatprep.subr.mxu0 0.0
    %125 = vmatpush1.msra.mxu0 %v91
    %126 = vmatprep.subr.mxu0 0.0
    %127 = vmatpush1.msra.mxu0 %v92
    %128 = vmatprep.subr.mxu0 0.0
    %129 = vmatpush1.msra.mxu0 %v93
    %130 = vmatprep.subr.mxu0 0.0
    %131 = vmatpush1.msra.mxu0 %v94
    %132 = vmatprep.subr.mxu0 0.0
    %133 = vmatpush1.msra.mxu0 %v95
    %134 = vmatprep.subr.mxu0 0.0
    %135 = vmatpush1.msra.mxu0 %v96
    %136 = vmatprep.subr.mxu0 0.0
    %137 = vmatpush1.msra.mxu0 0.0
    %138 = vmatprep.subr.mxu0 0.0
    %139 = vmatpush1.msra.mxu0 0.0
    %140 = vmatprep.subr.mxu0 0.0
    %141 = vmatpush1.msra.mxu0 0.0
    %142 = vmatprep.subr.mxu0 0.0
    %143 = vmatpush1.msra.mxu0 0.0
    %144 = vmatprep.subr.mxu0 0.0
    %145 = vmatpush1.msra.mxu0 0.0
    %146 = vmatprep.subr.mxu0 0.0
    %147 = vmatpush1.msra.mxu0 0.0
    %148 = vmatprep.subr.mxu0 0.0
    %149 = vmatpush1.msra.mxu0 0.0
    %150 = vmatprep.subr.mxu0 0.0
    %151 = vmatpush1.msra.mxu0 0.0
    %152 = vmatprep.subr.mxu0 0.0
    %153 = vmatpush1.msra.mxu0 0.0
    %154 = vmatprep.subr.mxu0 0.0
    %155 = vmatpush1.msra.mxu0 0.0
    %156 = vmatprep.subr.mxu0 0.0
    %157 = vmatpush1.msra.mxu0 0.0
    %158 = vmatprep.subr.mxu0 0.0
    %159 = vmatpush1.msra.mxu0 0.0
    %160 = vmatprep.subr.mxu0 0.0
    %161 = vmatpush1.msra.mxu0 0.0
    %162 = vmatprep.subr.mxu0 0.0
    %163 = vmatpush1.msra.mxu0 0.0
    %164 = vmatprep.subr.mxu0 0.0
    %165 = vmatpush1.msra.mxu0 0.0
    %166 = vmatprep.subr.mxu0 0.0
    %167 = vmatpush1.msra.mxu0 0.0
    %168 = vmatprep.mubr.f32.mxu0 0.0
    %169 = vmatmul.mubr.f32.gmra.mrb[0].mxu0 %v80
    %v170 = vpop.f32.mrb[0].mxu0
    %v171 = vadd.f32 %v102, %v170
    %v172 = vpop.f32.mrb[0].mxu0
    %173 = vdwg.mxu0
    %v174 = vmax.f32 %v171, 0.0
    %v175 = vld [vmem:[#allocation7] sm:$0xff]
    %v176 = vld [vmem:[#allocation7 + $0x8] sm:$0xff]
    %v177 = vld [vmem:[#allocation7 + $0x10] sm:$0xff]
    %v178 = vld [vmem:[#allocation7 + $0x18] sm:$0xff]
    %v179 = vld [vmem:[#allocation7 + $0x20] sm:$0xff]
    %v180 = vld [vmem:[#allocation7 + $0x28] sm:$0xff]
    %v181 = vld [vmem:[#allocation7 + $0x30] sm:$0xff]
    %v182 = vld [vmem:[#allocation7 + $0x38] sm:$0xff]
    %v183 = vld [vmem:[#allocation7 + $0x40] sm:$0xff]
    %v184 = vld [vmem:[#allocation7 + $0x48] sm:$0xff]
    %v185 = vld [vmem:[#allocation7 + $0x50] sm:$0xff]
    %v186 = vld [vmem:[#allocation7 + $0x58] sm:$0xff]
    %v187 = vld [vmem:[#allocation7 + $0x60] sm:$0xff]
    %v188 = vld [vmem:[#allocation7 + $0x68] sm:$0xff]
    %v189 = vld [vmem:[#allocation7 + $0x70] sm:$0xff]
    %v190 = vld [vmem:[#allocation7 + $0x78] sm:$0xff]
    %v191 = vld [vmem:[%s4] sm:$0x1]
    %v193 = vlaneseq
    %v194 = vshrl.u32 %v193, 7
    %v195 = vsub.s32 0, %v194
    %v196 = vrot.slane %v191, %v195
    %198 = vmatprep.subr.mxu0 0.0
    %199 = vmatpush1.msra.mxu0 %v175
    %200 = vmatprep.subr.mxu0 0.0
    %201 = vmatpush1.msra.mxu0 %v176
    %202 = vmatprep.subr.mxu0 0.0
    %203 = vmatpush1.msra.mxu0 %v177
    %204 = vmatprep.subr.mxu0 0.0
    %205 = vmatpush1.msra.mxu0 %v178
    %206 = vmatprep.subr.mxu0 0.0
    %207 = vmatpush1.msra.mxu0 %v179
    %208 = vmatprep.subr.mxu0 0.0
    %209 = vmatpush1.msra.mxu0 %v180
    %210 = vmatprep.subr.mxu0 0.0
    %211 = vmatpush1.msra.mxu0 %v181
    %212 = vmatprep.subr.mxu0 0.0
    %213 = vmatpush1.msra.mxu0 %v182
    %214 = vmatprep.subr.mxu0 0.0
    %215 = vmatpush1.msra.mxu0 %v183
    %216 = vmatprep.subr.mxu0 0.0
    %217 = vmatpush1.msra.mxu0 %v184
    %218 = vmatprep.subr.mxu0 0.0
    %219 = vmatpush1.msra.mxu0 %v185
    %220 = vmatprep.subr.mxu0 0.0
    %221 = vmatpush1.msra.mxu0 %v186
    %222 = vmatprep.subr.mxu0 0.0
    %223 = vmatpush1.msra.mxu0 %v187
    %224 = vmatprep.subr.mxu0 0.0
    %225 = vmatpush1.msra.mxu0 %v188
    %226 = vmatprep.subr.mxu0 0.0
    %227 = vmatpush1.msra.mxu0 %v189
    %228 = vmatprep.subr.mxu0 0.0
    %229 = vmatpush1.msra.mxu0 %v190
    %230 = vmatprep.subr.mxu0 0.0
    %231 = vmatpush1.msra.mxu0 0.0
    %232 = vmatprep.subr.mxu0 0.0
    %233 = vmatpush1.msra.mxu0 0.0
    %234 = vmatprep.subr.mxu0 0.0
    %235 = vmatpush1.msra.mxu0 0.0
    %236 = vmatprep.subr.mxu0 0.0
    %237 = vmatpush1.msra.mxu0 0.0
    %238 = vmatprep.subr.mxu0 0.0
    %239 = vmatpush1.msra.mxu0 0.0
    %240 = vmatprep.subr.mxu0 0.0
    %241 = vmatpush1.msra.mxu0 0.0
    %242 = vmatprep.subr.mxu0 0.0
    %243 = vmatpush1.msra.mxu0 0.0
    %244 = vmatprep.subr.mxu0 0.0
    %245 = vmatpush1.msra.mxu0 0.0
    %246 = vmatprep.subr.mxu0 0.0
    %247 = vmatpush1.msra.mxu0 0.0
    %248 = vmatprep.subr.mxu0 0.0
    %249 = vmatpush1.msra.mxu0 0.0
    %250 = vmatprep.subr.mxu0 0.0
    %251 = vmatpush1.msra.mxu0 0.0
    %252 = vmatprep.subr.mxu0 0.0
    %253 = vmatpush1.msra.mxu0 0.0
    %254 = vmatprep.subr.mxu0 0.0
    %255 = vmatpush1.msra.mxu0 0.0
    %256 = vmatprep.subr.mxu0 0.0
    %257 = vmatpush1.msra.mxu0 0.0
    %258 = vmatprep.subr.mxu0 0.0
    %259 = vmatpush1.msra.mxu0 0.0
    %260 = vmatprep.subr.mxu0 0.0
    %261 = vmatpush1.msra.mxu0 0.0
    %262 = vmatprep.mubr.f32.mxu0 0.0
    %263 = vmatmul.mubr.f32.gmra.mrb[0].mxu0 %v174
    %v264 = vpop.f32.mrb[0].mxu0
    %v265 = vadd.f32 %v196, %v264
    %v266 = vpop.f32.mrb[0].mxu0
    %267 = vdwg.mxu0
    %v268 = vmax.f32 %v265, 0.0
    %v269 = vld [vmem:[#allocation8] sm:$0xff]
    %v270 = vld [vmem:[#allocation8 + $0x8] sm:$0xff]
    %v271 = vld [vmem:[#allocation8 + $0x10] sm:$0xff]
    %v272 = vld [vmem:[#allocation8 + $0x18] sm:$0xff]
    %v273 = vld [vmem:[#allocation8 + $0x20] sm:$0xff]
    %v274 = vld [vmem:[#allocation8 + $0x28] sm:$0xff]
    %v275 = vld [vmem:[#allocation8 + $0x30] sm:$0xff]
    %v276 = vld [vmem:[#allocation8 + $0x38] sm:$0xff]
    %v277 = vld [vmem:[#allocation8 + $0x40] sm:$0xff]
    %v278 = vld [vmem:[#allocation8 + $0x48] sm:$0xff]
    %v279 = vld [vmem:[#allocation8 + $0x50] sm:$0xff]
    %v280 = vld [vmem:[#allocation8 + $0x58] sm:$0xff]
    %v281 = vld [vmem:[#allocation8 + $0x60] sm:$0xff]
    %v282 = vld [vmem:[#allocation8 + $0x68] sm:$0xff]
    %v283 = vld [vmem:[#allocation8 + $0x70] sm:$0xff]
    %v284 = vld [vmem:[#allocation8 + $0x78] sm:$0xff]
    %v285 = vld [vmem:[%s6] sm:$0x1]
    %v287 = vlaneseq
    %v288 = vshrl.u32 %v287, 7
    %v289 = vsub.s32 0, %v288
    %v290 = vrot.slane %v285, %v289
    %292 = vmatprep.subr.mxu0 0.0
    %293 = vmatpush1.msra.mxu0 %v269
    %294 = vmatprep.subr.mxu0 0.0
    %295 = vmatpush1.msra.mxu0 %v270
    %296 = vmatprep.subr.mxu0 0.0
    %297 = vmatpush1.msra.mxu0 %v271
    %298 = vmatprep.subr.mxu0 0.0
    %299 = vmatpush1.msra.mxu0 %v272
    %300 = vmatprep.subr.mxu0 0.0
    %301 = vmatpush1.msra.mxu0 %v273
    %302 = vmatprep.subr.mxu0 0.0
    %303 = vmatpush1.msra.mxu0 %v274
    %304 = vmatprep.subr.mxu0 0.0
    %305 = vmatpush1.msra.mxu0 %v275
    %306 = vmatprep.subr.mxu0 0.0
    %307 = vmatpush1.msra.mxu0 %v276
    %308 = vmatprep.subr.mxu0 0.0
    %309 = vmatpush1.msra.mxu0 %v277
    %310 = vmatprep.subr.mxu0 0.0
    %311 = vmatpush1.msra.mxu0 %v278
    %312 = vmatprep.subr.mxu0 0.0
    %313 = vmatpush1.msra.mxu0 %v279
    %314 = vmatprep.subr.mxu0 0.0
    %315 = vmatpush1.msra.mxu0 %v280
    %316 = vmatprep.subr.mxu0 0.0
    %317 = vmatpush1.msra.mxu0 %v281
    %318 = vmatprep.subr.mxu0 0.0
    %319 = vmatpush1.msra.mxu0 %v282
    %320 = vmatprep.subr.mxu0 0.0
    %321 = vmatpush1.msra.mxu0 %v283
    %322 = vmatprep.subr.mxu0 0.0
    %323 = vmatpush1.msra.mxu0 %v284
    %324 = vmatprep.subr.mxu0 0.0
    %325 = vmatpush1.msra.mxu0 0.0
    %326 = vmatprep.subr.mxu0 0.0
    %327 = vmatpush1.msra.mxu0 0.0
    %328 = vmatprep.subr.mxu0 0.0
    %329 = vmatpush1.msra.mxu0 0.0
    %330 = vmatprep.subr.mxu0 0.0
    %331 = vmatpush1.msra.mxu0 0.0
    %332 = vmatprep.subr.mxu0 0.0
    %333 = vmatpush1.msra.mxu0 0.0
    %334 = vmatprep.subr.mxu0 0.0
    %335 = vmatpush1.msra.mxu0 0.0
    %336 = vmatprep.subr.mxu0 0.0
    %337 = vmatpush1.msra.mxu0 0.0
    %338 = vmatprep.subr.mxu0 0.0
    %339 = vmatpush1.msra.mxu0 0.0
    %340 = vmatprep.subr.mxu0 0.0
    %341 = vmatpush1.msra.mxu0 0.0
    %342 = vmatprep.subr.mxu0 0.0
    %343 = vmatpush1.msra.mxu0 0.0
    %344 = vmatprep.subr.mxu0 0.0
    %345 = vmatpush1.msra.mxu0 0.0
    %346 = vmatprep.subr.mxu0 0.0
    %347 = vmatpush1.msra.mxu0 0.0
    %348 = vmatprep.subr.mxu0 0.0
    %349 = vmatpush1.msra.mxu0 0.0
    %350 = vmatprep.subr.mxu0 0.0
    %351 = vmatpush1.msra.mxu0 0.0
    %352 = vmatprep.subr.mxu0 0.0
    %353 = vmatpush1.msra.mxu0 0.0
    %354 = vmatprep.subr.mxu0 0.0
    %355 = vmatpush1.msra.mxu0 0.0
    %356 = vmatprep.mubr.f32.mxu0 0.0
    %357 = vmatmul.mubr.f32.gmra.mrb[0].mxu0 %v268
    %v358 = vpop.f32.mrb[0].mxu0
    %v359 = vadd.f32 %v290, %v358
    %v360 = vpop.f32.mrb[0].mxu0
    %361 = vdwg.mxu0
    %362 = vst [vmem:[#allocation10] sm:$0xff] %v359
    // Predicated region
    $region46: #{tpu_custom_call.1} parent=1 // pred_check
      _
    $region47: #{tpu_custom_call.1} parent=1 // pred_check_branch
      %364 = sbr.rel (0) target = $region49
    $region48: #{tpu_custom_call.1} parent=1 // pred_region
      %s366 = ssub.s32 128, 128
      %367 = vsyncadd [#allocation4], %s366
      %s369 = sshll.u32 [#allocation10], 4
      %s370 = int_to_ptr.vmem [resolvable:$true] %s369
      %372 = dma.vmem_to_hbm [thread:$0]  %s370, 128, %s7, [#allocation4]
    $region49: #{tpu_custom_call.1} parent=1 // pred_fallthru
      _
    // Predicated region
    $region50: #{tpu_custom_call.1} parent=1 // pred_check
      _
    $region51: #{tpu_custom_call.1} parent=1 // pred_check_branch
      %374 = sbr.rel (0) target = $region53
    $region52: #{tpu_custom_call.1} parent=1 // pred_region
      %375 = dma.done [#allocation4], 128
    $region53: #{tpu_custom_call.1} parent=1 // pred_fallthru
      _
    %376 = vsyncpa [#allocation3], 1
    %377 = vsyncpa [#allocation6], 1
    %378 = vsyncpa [#allocation9], 1
    %379 = vsyncpa [#allocation4], 1

</llo_original>
